<compile_context>
chip_gen: v7x
topology: tpu7x:2x2x1
jax: 0.10.0
libtpu: 0.0.40
codegen_flags: <defaults>
</compile_context>

<pallas_src>
import numpy as np
import jax
import jax.numpy as jnp
from jax.experimental import pallas as pl
from jax.experimental.pallas import tpu as pltpu


def _gelu_tanh(x):
    # TODO(synk): PyTorch nn.GELU() defaults to the exact erf formulation; the
    # tanh approximation is used since erf has no guaranteed Mosaic lowering
    # (max abs error ~1e-3).
    c = jnp.float32(np.sqrt(2.0 / np.pi))
    return 0.5 * x * (1.0 + jnp.tanh(c * (x + 0.044715 * x * x * x)))


def _pad_lanes(n):
    """Round up to a multiple of 128 (lane width)."""
    return ((n + 127) // 128) * 128


def _pad_sublanes(n):
    """Round up to a multiple of 8 (sublane count)."""
    return ((n + 7) // 8) * 8


def _make_fused_kernel(kh_list):
    """Fused conv-stack kernel; whole padded batch in ONE invocation.

    Ref layout (all lane-dense, K/N padded to multiples of 128):
      x_ref    : (Mpad, Kpad0)          bf16  rows = b*H + h (row-flattened NHWC)
      r_ref[l] : (KH_l, Kpad_l, Npad_l) bf16  block-banded, zero-padded weights
      b_ref[l] : (1, Npad_l)            f32   width-tiled, zero-padded bias
      o_ref    : (Mpad, Npad_last)      f32

    For each layer, each kernel-row tap i contributes one MXU matmul with the
    activation rows rotated up by i (XLU sublane roll).  Rows that mix batches
    after the roll are garbage and are discarded in the wrapper.
    """
    n = len(kh_list)

    def kernel(*refs):
        x_ref, o_ref = refs[0], refs[-1]
        p_refs = refs[1:-1]
        # Working activation kept f32 in vregs (clean 32-bit sublane rolls,
        # f32 GELU); cast to bf16 at each MXU operand.
        act = x_ref[...].astype(jnp.float32)
        m = act.shape[0]
        for l, kh in enumerate(kh_list):
            r_ref, b_ref = p_refs[2 * l], p_refs[2 * l + 1]
            # Tap 0: accumulator initialized from the dot + bias (no zeros pass).
            acc = jnp.dot(act.astype(jnp.bfloat16), r_ref[0],
                          preferred_element_type=jnp.float32) + b_ref[...]
            for i in range(1, kh):                       # static, unrolled
                # out[r] = act[(r + i) % m] : sublane rotation on the XLU slot.
                act_i = pltpu.roll(act, shift=m - i, axis=0)
                acc = acc + jnp.dot(act_i.astype(jnp.bfloat16), r_ref[i],
                                    preferred_element_type=jnp.float32)
            if l != n - 1:
                act = _gelu_tanh(acc)                    # stays in vregs, f32
            else:
                o_ref[...] = acc.astype(o_ref.dtype)     # lane-dense store

    return kernel


class Conv2dsPallas:
    """Pallas port of Conv2ds: stack of valid Conv2d layers with GELU between."""

    def __init__(self, in_channels, out_channels, kernels, frame_shape=None, key=None):
        self.in_channels = list(in_channels)
        self.out_channels = list(out_channels)
        self.kernels = list(kernels)
        self.frame_shape = frame_shape if frame_shape is not None else (0, 0)
        key = key if key is not None else jax.random.PRNGKey(0)
        # Deterministic parameter init (PyTorch Conv2d-style uniform fan-in bound).
        self.params = []
        for ci, co, k in zip(self.in_channels, self.out_channels, self.kernels):
            key, wk, bk = jax.random.split(key, 3)
            bound = 1.0 / np.sqrt(ci * k * k)
            w = jax.random.uniform(wk, (co, ci, k, k), jnp.float32, -bound, bound)
            b = jax.random.uniform(bk, (co,), jnp.float32, -bound, bound)
            self.params.append((w, b))
        self._fwd_cache = {}   # (B, H, W) -> (jitted forward fn, packed args)

    # ---- parameter packing (plain JAX glue, done once per (H, W)) -----------
    def _packed_params(self, H, W):
        """Block-banded, lane/K-padded bf16 weights + tiled f32 biases.

        R[i][(w'+j)*Cin + c, w'*Cout + co] = W_torch[co, c, i, j] so that
          acc[h, w'*Cout+co] = sum_i (X_flat[h+i, :] @ R[i])[w'*Cout+co]
        equals the valid, stride-1 convolution output.  Padded rows/cols of R
        (and of the bias) are zero.
        """
        packed, meta = [], []
        h, w = H, W
        k_pad = _pad_lanes(w * self.in_channels[0])
        for (wt, bias) in self.params:
            co, ci, kh, kw = wt.shape
            ho, wo = h - kh + 1, w - kw + 1
            n_valid = wo * co
            n_pad = _pad_lanes(n_valid)
            wt_t = jnp.transpose(wt, (2, 3, 1, 0))            # (KH, KW, Cin, Cout)
            eye = jnp.eye(w, dtype=jnp.float32)
            rows = []
            for i in range(kh):
                ri = jnp.zeros((w * ci, n_valid), jnp.float32)
                for j in range(kw):
                    # eye[:, j:j+wo][w_in, w_out] == [w_in == w_out + j]
                    ri = ri + jnp.kron(eye[:, j:j + wo], wt_t[i, j])
                ri = jnp.pad(ri, ((0, k_pad - w * ci), (0, n_pad - n_valid)))
                rows.append(ri)
            r = jnp.stack(rows).astype(jnp.bfloat16)          # (KH, Kpad, Npad) bf16
            bt = jnp.pad(jnp.tile(bias, wo),
                         (0, n_pad - n_valid)).reshape(1, n_pad).astype(jnp.float32)
            packed += [r, bt]
            meta.append((kh, ho, wo, co, k_pad, n_pad))
            h, w = ho, wo
            k_pad = n_pad          # next layer's K = this layer's padded N
        return packed, meta

    def _build_forward(self, B, H, W):
        c0 = self.in_channels[0]
        packed, meta = self._packed_params(H, W)
        kh_list = [m[0] for m in meta]
        k_pad0 = meta[0][4]
        _, ho_l, wo_l, co_l, _, n_pad_l = meta[-1]
        m_rows = B * H
        m_pad = _pad_sublanes(m_rows)

        kernel = _make_fused_kernel(kh_list)

        in_specs = [pl.BlockSpec((m_pad, k_pad0), lambda g: (0, 0))]
        nbytes = m_pad * k_pad0 * 2 + m_pad * n_pad_l * 4
        for (kh, ho, wo, co, kp, npad) in meta:
            in_specs.append(pl.BlockSpec((kh, kp, npad), lambda g: (0, 0, 0)))
            in_specs.append(pl.BlockSpec((1, npad), lambda g: (0, 0)))
            nbytes += kh * kp * npad * 2 + npad * 4
        out_spec = pl.BlockSpec((m_pad, n_pad_l), lambda g: (0, 0))

        # Explicit VMEM budget (operands are not pipelined across steps here,
        # so 2x footprint + headroom is generous); matters on v7x (64 MiB).
        vmem_limit = int(min(32 << 20, 2 * nbytes + (8 << 20)))

        conv_call = pl.pallas_call(
            kernel,
            out_shape=jax.ShapeDtypeStruct((m_pad, n_pad_l), jnp.float32),
            grid_spec=pltpu.PrefetchScalarGridSpec(
                num_scalar_prefetch=0,
                grid=(1,),                       # batch folded into matmul M
                in_specs=in_specs,
                out_specs=out_spec,
            ),
            compiler_params=pltpu.CompilerParams(
                dimension_semantics=("arbitrary",),
                vmem_limit_bytes=vmem_limit,
            ),
        )

        def forward(x, *flat_params):
            # NCHW -> NHWC -> row-flattened (B*H, W*Cin), zero-padded, bf16.
            y = x.reshape(B, c0, H, W)
            y = jnp.transpose(y, (0, 2, 3, 1)).reshape(B * H, W * c0)
            y = jnp.pad(y, ((0, m_pad - B * H), (0, k_pad0 - W * c0)))
            y = y.astype(jnp.bfloat16)
            out2d = conv_call(y, *flat_params)
            # Drop padded/garbage rows and padded lanes, back to NCHW.
            out = out2d[:B * H].reshape(B, H, n_pad_l)[:, :ho_l, :wo_l * co_l]
            out = out.reshape(B, ho_l, wo_l, co_l)
            return jnp.transpose(out, (0, 3, 1, 2)).astype(x.dtype)

        return jax.jit(forward), packed

    def __call__(self, x):
        # x: (B, in_channels[0] * H * W), flat, like the PyTorch forward expects.
        if self.frame_shape[0] == 0:
            s = int(round(np.sqrt(x.shape[1] / self.in_channels[0])))
            H, W = s, s                                    # no self-mutation
        else:
            H, W = int(self.frame_shape[0]), int(self.frame_shape[1])
        B = x.shape[0]
        key = (B, H, W)
        if key not in self._fwd_cache:
            self._fwd_cache[key] = self._build_forward(B, H, W)
        fwd, packed = self._fwd_cache[key]
        return fwd(x, *packed)


def conv2ds_reference(x, params, in_channels, frame_shape):
    """Pure-JAX reference matching the PyTorch forward (with tanh-GELU)."""
    B = x.shape[0]
    h, w_ = frame_shape
    y = x.reshape(B, in_channels[0], h, w_)
    n = len(params)
    for idx, (w, b) in enumerate(params):
        y = jax.lax.conv_general_dilated(
            y, w, window_strides=(1, 1), padding="VALID",
            dimension_numbers=("NCHW", "OIHW", "NCHW"),
            precision=jax.lax.Precision.HIGHEST)
        y = y + b[None, :, None, None]
        if idx != n - 1:
            y = _gelu_tanh(y)
    return y


if __name__ == "__main__":
    B = 2
    in_channels = [4, 8]
    out_channels = [8, 6]
    kernels = [3, 3]
    H = W = 16

    model = Conv2dsPallas(in_channels, out_channels, kernels,
                          key=jax.random.PRNGKey(0))

    x = jax.random.normal(jax.random.PRNGKey(0),
                          (B, in_channels[0] * H * W), jnp.float32)

    out = model(x)
    out = jax.block_until_ready(out)

    assert out.shape == (B, out_channels[-1], H - 4, W - 4), out.shape

    # Tolerance covers bf16 weight/operand storage + default MXU accumulation
    # in the kernel vs f32 HIGHEST in the reference (measured error ~3e-3).
    ref = conv2ds_reference(x, model.params, in_channels, (H, W))
    np.testing.assert_allclose(np.asarray(out), np.asarray(ref),
                               rtol=2e-2, atol=2e-2)

    print("KERNEL_OK")
</pallas_src>

<mosaic_0001>
module attributes {stable_mosaic.version = 11 : i64} {
  func.func @kernel(%arg0: i32, %arg1: memref<32x128xbf16, #tpu.memory_space<vmem>>, %arg2: memref<3x128x128xbf16, #tpu.memory_space<vmem>>, %arg3: memref<1x128xf32, #tpu.memory_space<vmem>>, %arg4: memref<3x128x128xbf16, #tpu.memory_space<vmem>>, %arg5: memref<1x128xf32, #tpu.memory_space<vmem>>, %arg6: memref<32x128xf32, #tpu.memory_space<vmem>>) attributes {dimension_semantics = [#tpu.dimension_semantics<arbitrary>], iteration_bounds = array<i64: 1>, scalar_prefetch = 0 : i64, scratch_operands = 0 : i64, tpu.core_type = #tpu.core_type<tc>, window_params = [{pipeline_mode = #tpu.pipeline_mode<synchronous>, transform_indices = @transform_0, window_bounds = array<i64: 32, 128>}, {pipeline_mode = #tpu.pipeline_mode<synchronous>, transform_indices = @transform_1, window_bounds = array<i64: 3, 128, 128>}, {pipeline_mode = #tpu.pipeline_mode<synchronous>, transform_indices = @transform_2, window_bounds = array<i64: 1, 128>}, {pipeline_mode = #tpu.pipeline_mode<synchronous>, transform_indices = @transform_3, window_bounds = array<i64: 3, 128, 128>}, {pipeline_mode = #tpu.pipeline_mode<synchronous>, transform_indices = @transform_4, window_bounds = array<i64: 1, 128>}, {pipeline_mode = #tpu.pipeline_mode<synchronous>, transform_indices = @transform_5, window_bounds = array<i64: 32, 128>}]} {
    %c0 = arith.constant 0 : index
    %c0_0 = arith.constant 0 : index
    %0 = vector.load %arg1[%c0, %c0_0] : memref<32x128xbf16, #tpu.memory_space<vmem>>, vector<32x128xbf16>
    %1 = arith.extf %0 : vector<32x128xbf16> to vector<32x128xf32>
    %2 = arith.truncf %1 : vector<32x128xf32> to vector<32x128xbf16>
    %c0_1 = arith.constant 0 : index
    %c0_2 = arith.constant 0 : index
    %c0_3 = arith.constant 0 : index
    %3 = vector.load %arg2[%c0_1, %c0_2, %c0_3] : memref<3x128x128xbf16, #tpu.memory_space<vmem>>, vector<1x128x128xbf16>
    %4 = vector.shape_cast %3 : vector<1x128x128xbf16> to vector<128x128xbf16>
    %cst = arith.constant dense<0.000000e+00> : vector<32x128xf32>
    %5 = tpu.matmul %2, %4, %cst {dimension_numbers = #tpu.dot_dimension_numbers<[1], [0], [0], [1], [0, 0, 1, 1], [], []>} : vector<32x128xbf16>, vector<128x128xbf16>, vector<32x128xf32> -> vector<32x128xf32>
    %c0_4 = arith.constant 0 : index
    %c0_5 = arith.constant 0 : index
    %6 = vector.load %arg3[%c0_4, %c0_5] : memref<1x128xf32, #tpu.memory_space<vmem>>, vector<1x128xf32>
    %7 = vector.broadcast %6 : vector<1x128xf32> to vector<32x128xf32>
    %8 = arith.addf %5, %7 : vector<32x128xf32>
    %c31_i32 = arith.constant 31 : i32
    %9 = tpu.dynamic_rotate %1 by %c31_i32 dim 0 : vector<32x128xf32>, i32 -> vector<32x128xf32>
    %10 = arith.truncf %9 : vector<32x128xf32> to vector<32x128xbf16>
    %c1 = arith.constant 1 : index
    %c0_6 = arith.constant 0 : index
    %c0_7 = arith.constant 0 : index
    %11 = vector.load %arg2[%c1, %c0_6, %c0_7] : memref<3x128x128xbf16, #tpu.memory_space<vmem>>, vector<1x128x128xbf16>
    %12 = vector.shape_cast %11 : vector<1x128x128xbf16> to vector<128x128xbf16>
    %cst_8 = arith.constant dense<0.000000e+00> : vector<32x128xf32>
    %13 = tpu.matmul %10, %12, %cst_8 {dimension_numbers = #tpu.dot_dimension_numbers<[1], [0], [0], [1], [0, 0, 1, 1], [], []>} : vector<32x128xbf16>, vector<128x128xbf16>, vector<32x128xf32> -> vector<32x128xf32>
    %14 = arith.addf %8, %13 : vector<32x128xf32>
    %c30_i32 = arith.constant 30 : i32
    %15 = tpu.dynamic_rotate %1 by %c30_i32 dim 0 : vector<32x128xf32>, i32 -> vector<32x128xf32>
    %16 = arith.truncf %15 : vector<32x128xf32> to vector<32x128xbf16>
    %c2 = arith.constant 2 : index
    %c0_9 = arith.constant 0 : index
    %c0_10 = arith.constant 0 : index
    %17 = vector.load %arg2[%c2, %c0_9, %c0_10] : memref<3x128x128xbf16, #tpu.memory_space<vmem>>, vector<1x128x128xbf16>
    %18 = vector.shape_cast %17 : vector<1x128x128xbf16> to vector<128x128xbf16>
    %cst_11 = arith.constant dense<0.000000e+00> : vector<32x128xf32>
    %19 = tpu.matmul %16, %18, %cst_11 {dimension_numbers = #tpu.dot_dimension_numbers<[1], [0], [0], [1], [0, 0, 1, 1], [], []>} : vector<32x128xbf16>, vector<128x128xbf16>, vector<32x128xf32> -> vector<32x128xf32>
    %20 = arith.addf %14, %19 : vector<32x128xf32>
    %cst_12 = arith.constant 5.000000e-01 : f32
    %21 = vector.broadcast %cst_12 : f32 to vector<32x128xf32>
    %22 = arith.mulf %21, %20 : vector<32x128xf32>
    %cst_13 = arith.constant 4.471500e-02 : f32
    %23 = vector.broadcast %cst_13 : f32 to vector<32x128xf32>
    %24 = arith.mulf %23, %20 : vector<32x128xf32>
    %25 = arith.mulf %24, %20 : vector<32x128xf32>
    %26 = arith.mulf %25, %20 : vector<32x128xf32>
    %27 = arith.addf %20, %26 : vector<32x128xf32>
    %cst_14 = arith.constant 0.797884583 : f32
    %28 = vector.broadcast %cst_14 : f32 to vector<32x128xf32>
    %29 = arith.mulf %28, %27 : vector<32x128xf32>
    %30 = math.tanh %29 : vector<32x128xf32>
    %cst_15 = arith.constant 1.000000e+00 : f32
    %31 = vector.broadcast %cst_15 : f32 to vector<32x128xf32>
    %32 = arith.addf %31, %30 : vector<32x128xf32>
    %33 = arith.mulf %22, %32 : vector<32x128xf32>
    %34 = arith.truncf %33 : vector<32x128xf32> to vector<32x128xbf16>
    %c0_16 = arith.constant 0 : index
    %c0_17 = arith.constant 0 : index
    %c0_18 = arith.constant 0 : index
    %35 = vector.load %arg4[%c0_16, %c0_17, %c0_18] : memref<3x128x128xbf16, #tpu.memory_space<vmem>>, vector<1x128x128xbf16>
    %36 = vector.shape_cast %35 : vector<1x128x128xbf16> to vector<128x128xbf16>
    %cst_19 = arith.constant dense<0.000000e+00> : vector<32x128xf32>
    %37 = tpu.matmul %34, %36, %cst_19 {dimension_numbers = #tpu.dot_dimension_numbers<[1], [0], [0], [1], [0, 0, 1, 1], [], []>} : vector<32x128xbf16>, vector<128x128xbf16>, vector<32x128xf32> -> vector<32x128xf32>
    %c0_20 = arith.constant 0 : index
    %c0_21 = arith.constant 0 : index
    %38 = vector.load %arg5[%c0_20, %c0_21] : memref<1x128xf32, #tpu.memory_space<vmem>>, vector<1x128xf32>
    %39 = vector.broadcast %38 : vector<1x128xf32> to vector<32x128xf32>
    %40 = arith.addf %37, %39 : vector<32x128xf32>
    %c31_i32_22 = arith.constant 31 : i32
    %41 = tpu.dynamic_rotate %33 by %c31_i32_22 dim 0 : vector<32x128xf32>, i32 -> vector<32x128xf32>
    %42 = arith.truncf %41 : vector<32x128xf32> to vector<32x128xbf16>
    %c1_23 = arith.constant 1 : index
    %c0_24 = arith.constant 0 : index
    %c0_25 = arith.constant 0 : index
    %43 = vector.load %arg4[%c1_23, %c0_24, %c0_25] : memref<3x128x128xbf16, #tpu.memory_space<vmem>>, vector<1x128x128xbf16>
    %44 = vector.shape_cast %43 : vector<1x128x128xbf16> to vector<128x128xbf16>
    %cst_26 = arith.constant dense<0.000000e+00> : vector<32x128xf32>
    %45 = tpu.matmul %42, %44, %cst_26 {dimension_numbers = #tpu.dot_dimension_numbers<[1], [0], [0], [1], [0, 0, 1, 1], [], []>} : vector<32x128xbf16>, vector<128x128xbf16>, vector<32x128xf32> -> vector<32x128xf32>
    %46 = arith.addf %40, %45 : vector<32x128xf32>
    %c30_i32_27 = arith.constant 30 : i32
    %47 = tpu.dynamic_rotate %33 by %c30_i32_27 dim 0 : vector<32x128xf32>, i32 -> vector<32x128xf32>
    %48 = arith.truncf %47 : vector<32x128xf32> to vector<32x128xbf16>
    %c2_28 = arith.constant 2 : index
    %c0_29 = arith.constant 0 : index
    %c0_30 = arith.constant 0 : index
    %49 = vector.load %arg4[%c2_28, %c0_29, %c0_30] : memref<3x128x128xbf16, #tpu.memory_space<vmem>>, vector<1x128x128xbf16>
    %50 = vector.shape_cast %49 : vector<1x128x128xbf16> to vector<128x128xbf16>
    %cst_31 = arith.constant dense<0.000000e+00> : vector<32x128xf32>
    %51 = tpu.matmul %48, %50, %cst_31 {dimension_numbers = #tpu.dot_dimension_numbers<[1], [0], [0], [1], [0, 0, 1, 1], [], []>} : vector<32x128xbf16>, vector<128x128xbf16>, vector<32x128xf32> -> vector<32x128xf32>
    %52 = arith.addf %46, %51 : vector<32x128xf32>
    %c0_32 = arith.constant 0 : index
    %c0_33 = arith.constant 0 : index
    %53 = vector.load %arg6[%c0_32, %c0_33] : memref<32x128xf32, #tpu.memory_space<vmem>>, vector<32x128xf32>
    tpu.vector_store %arg6[%c0_32, %c0_33], %52 {strides = array<i32>} : memref<32x128xf32, #tpu.memory_space<vmem>>, vector<32x128xf32>,
    return
  }
  func.func @transform_0(%arg0: i32) -> (i32, i32) {
    %c0_i32 = arith.constant 0 : i32
    %c0_i32_0 = arith.constant 0 : i32
    %c0_i32_1 = arith.constant 0 : i32
    return %c0_i32, %c0_i32_0 : i32, i32
  }
  func.func @transform_1(%arg0: i32) -> (i32, i32, i32) {
    %c0_i32 = arith.constant 0 : i32
    %c0_i32_0 = arith.constant 0 : i32
    %c0_i32_1 = arith.constant 0 : i32
    %c0_i32_2 = arith.constant 0 : i32
    return %c0_i32, %c0_i32_0, %c0_i32_1 : i32, i32, i32
  }
  func.func @transform_2(%arg0: i32) -> (i32, i32) {
    %c0_i32 = arith.constant 0 : i32
    %c0_i32_0 = arith.constant 0 : i32
    %c0_i32_1 = arith.constant 0 : i32
    return %c0_i32, %c0_i32_0 : i32, i32
  }
  func.func @transform_3(%arg0: i32) -> (i32, i32, i32) {
    %c0_i32 = arith.constant 0 : i32
    %c0_i32_0 = arith.constant 0 : i32
    %c0_i32_1 = arith.constant 0 : i32
    %c0_i32_2 = arith.constant 0 : i32
    return %c0_i32, %c0_i32_0, %c0_i32_1 : i32, i32, i32
  }
  func.func @transform_4(%arg0: i32) -> (i32, i32) {
    %c0_i32 = arith.constant 0 : i32
    %c0_i32_0 = arith.constant 0 : i32
    %c0_i32_1 = arith.constant 0 : i32
    return %c0_i32, %c0_i32_0 : i32, i32
  }
  func.func @transform_5(%arg0: i32) -> (i32, i32) {
    %c0_i32 = arith.constant 0 : i32
    %c0_i32_0 = arith.constant 0 : i32
    %c0_i32_1 = arith.constant 0 : i32
    return %c0_i32, %c0_i32_0 : i32, i32
  }
}

</mosaic_0001>

<llo_original>
// kernel: forward.1
$region0: #{forward.1}
  #allocation0 [shape = 'u32[]', space=smem, size = 0x4, offset = 0x4, fixed_abs, tag = 'smem constant byte address 0x4 - core index']
  #allocation1 [shape = 'u32[144,128]{1,0:T(1,128)}', space=vmem, size = 0x12000, scoped, tag = 'internal scratch']
  %s0 = inlined_call_operand.vmem [shape: bf16[32,128], index: 0, kind: input, shape index: {}]
  %s1 = inlined_call_operand.vmem [shape: bf16[3,128,128], index: 1, kind: input, shape index: {}]
  %s2 = inlined_call_operand.vmem [shape: f32[1,128], index: 2, kind: input, shape index: {}]
  %s3 = inlined_call_operand.vmem [shape: bf16[3,128,128], index: 3, kind: input, shape index: {}]
  %s4 = inlined_call_operand.vmem [shape: f32[1,128], index: 4, kind: input, shape index: {}]
  %s5 = inlined_call_operand.vmem [shape: f32[32,128], index: 5, kind: output, shape index: {}]
  %s6 = sld [smem:[#allocation0]]
  $region30: #{forward.1} parent=0
    _
  %s8 = ssub.s32 1, %s6
  %s9 = scalar_select 0, %s8, %s6
  // Predicated region
  $region2: #{forward.1} parent=0 // pred_check
    _
  $region3: #{forward.1} parent=0 // pred_check_branch
    %11 = sbr.rel (0) target = $region5
  $region4: #{forward.1} parent=0 // pred_region
    _
  $region5: #{forward.1} parent=0 // pred_fallthru
    _
  // Predicated region
  $region6: #{forward.1} parent=0 // pred_check
    _
  $region7: #{forward.1} parent=0 // pred_check_branch
    %13 = sbr.rel (0) target = $region9
  $region8: #{forward.1} parent=0 // pred_region
    _
  $region9: #{forward.1} parent=0 // pred_fallthru
    _
  // Predicated region
  $region10: #{forward.1} parent=0 // pred_check
    _
  $region11: #{forward.1} parent=0 // pred_check_branch
    %15 = sbr.rel (0) target = $region13
  $region12: #{forward.1} parent=0 // pred_region
    _
  $region13: #{forward.1} parent=0 // pred_fallthru
    _
  // Predicated region
  $region14: #{forward.1} parent=0 // pred_check
    _
  $region15: #{forward.1} parent=0 // pred_check_branch
    %17 = sbr.rel (0) target = $region17
  $region16: #{forward.1} parent=0 // pred_region
    _
  $region17: #{forward.1} parent=0 // pred_fallthru
    _
  // Predicated region
  $region18: #{forward.1} parent=0 // pred_check
    _
  $region19: #{forward.1} parent=0 // pred_check_branch
    %19 = sbr.rel (0) target = $region21
  $region20: #{forward.1} parent=0 // pred_region
    _
  $region21: #{forward.1} parent=0 // pred_fallthru
    _
  %v21 = vld [vmem:[%s0] sm:$0xf]
  %v22 = vld [vmem:[%s0 + $0x4] sm:$0xf]
  %v23 = vld [vmem:[%s0 + $0x8] sm:$0xf]
  %v24 = vld [vmem:[%s0 + $0xc] sm:$0xf]
  %v25 = vunpack.c.l.bf16 %v21
  %v26 = vunpack.c.l.bf16 %v22
  %v27 = vunpack.c.l.bf16 %v23
  %v28 = vunpack.c.l.bf16 %v24
  %v29 = vld [vmem:[%s1] sm:$0xf]
  %v30 = vld [vmem:[%s1 + $0x4] sm:$0xf]
  %v31 = vld [vmem:[%s1 + $0x8] sm:$0xf]
  %v32 = vld [vmem:[%s1 + $0xc] sm:$0xf]
  %v33 = vld [vmem:[%s1 + $0x10] sm:$0xf]
  %v34 = vld [vmem:[%s1 + $0x14] sm:$0xf]
  %v35 = vld [vmem:[%s1 + $0x18] sm:$0xf]
  %v36 = vld [vmem:[%s1 + $0x1c] sm:$0xf]
  %v37 = vld [vmem:[%s1 + $0x20] sm:$0xf]
  %v38 = vld [vmem:[%s1 + $0x24] sm:$0xf]
  %v39 = vld [vmem:[%s1 + $0x28] sm:$0xf]
  %v40 = vld [vmem:[%s1 + $0x2c] sm:$0xf]
  %v41 = vld [vmem:[%s1 + $0x30] sm:$0xf]
  %v42 = vld [vmem:[%s1 + $0x34] sm:$0xf]
  %v43 = vld [vmem:[%s1 + $0x38] sm:$0xf]
  %v44 = vld [vmem:[%s1 + $0x3c] sm:$0xf]
  %v45 = vld [vmem:[%s2] sm:$0x1]
  %v47 = vlaneseq
  %v48 = vshrl.u32 %v47, 7
  %v49 = vsub.s32 0, %v48
  %v50 = vrot.slane %v45, %v49
  %v56 = vunpack.c.l.b16 %v21
  %v57 = vunpack.c.l.b16 %v22
  %v58 = vunpack.c.l.b16 %v23
  %v59 = vunpack.c.l.b16 %v24
  %v60 = vpack.c.b16 %v57, %v56
  %v61 = vpack.c.b16 %v59, %v58
  %v80 = vunpack.c.l.b16 %v29
  %v81 = vunpack.c.l.b16 %v30
  %v82 = vunpack.c.l.b16 %v31
  %v83 = vunpack.c.l.b16 %v32
  %v84 = vunpack.c.l.b16 %v33
  %v85 = vunpack.c.l.b16 %v34
  %v86 = vunpack.c.l.b16 %v35
  %v87 = vunpack.c.l.b16 %v36
  %v88 = vunpack.c.l.b16 %v37
  %v89 = vunpack.c.l.b16 %v38
  %v90 = vunpack.c.l.b16 %v39
  %v91 = vunpack.c.l.b16 %v40
  %v92 = vunpack.c.l.b16 %v41
  %v93 = vunpack.c.l.b16 %v42
  %v94 = vunpack.c.l.b16 %v43
  %v95 = vunpack.c.l.b16 %v44
  %v96 = vpack.c.b16 %v81, %v80
  %v97 = vpack.c.b16 %v83, %v82
  %v98 = vpack.c.b16 %v85, %v84
  %v99 = vpack.c.b16 %v87, %v86
  %v100 = vpack.c.b16 %v89, %v88
  %v101 = vpack.c.b16 %v91, %v90
  %v102 = vpack.c.b16 %v93, %v92
  %v103 = vpack.c.b16 %v95, %v94
  %112 = vmatprep.subr.bf16.mxu0 0
  %113 = vmatpush1.bf16.msra.mxu0 %v96
  %114 = vmatprep.subr.bf16.mxu0 0
  %115 = vmatpush1.bf16.msra.mxu0 %v97
  %116 = vmatprep.subr.bf16.mxu0 0
  %117 = vmatpush1.bf16.msra.mxu0 %v98
  %118 = vmatprep.subr.bf16.mxu0 0
  %119 = vmatpush1.bf16.msra.mxu0 %v99
  %120 = vmatprep.subr.bf16.mxu0 0
  %121 = vmatpush1.bf16.msra.mxu0 %v100
  %122 = vmatprep.subr.bf16.mxu0 0
  %123 = vmatpush1.bf16.msra.mxu0 %v101
  %124 = vmatprep.subr.bf16.mxu0 0
  %125 = vmatpush1.bf16.msra.mxu0 %v102
  %126 = vmatprep.subr.bf16.mxu0 0
  %127 = vmatpush1.bf16.msra.mxu0 %v103
  %128 = vmatprep.subr.bf16.mxu0 0
  %129 = vmatpush1.bf16.msra.mxu0 0
  %130 = vmatprep.subr.bf16.mxu0 0
  %131 = vmatpush1.bf16.msra.mxu0 0
  %132 = vmatprep.subr.bf16.mxu0 0
  %133 = vmatpush1.bf16.msra.mxu0 0
  %134 = vmatprep.subr.bf16.mxu0 0
  %135 = vmatpush1.bf16.msra.mxu0 0
  %136 = vmatprep.subr.bf16.mxu0 0
  %137 = vmatpush1.bf16.msra.mxu0 0
  %138 = vmatprep.subr.bf16.mxu0 0
  %139 = vmatpush1.bf16.msra.mxu0 0
  %140 = vmatprep.subr.bf16.mxu0 0
  %141 = vmatpush1.bf16.msra.mxu0 0
  %142 = vmatprep.subr.bf16.mxu0 0
  %143 = vmatpush1.bf16.msra.mxu0 0
  %144 = vmatprep.mubr.bf16.mxu0 0
  %145 = vmatmul.mubr.bf16.gmra.mrb[0].mxu0 %v60
  %v146 = vpop.f32.mrb[0].mxu0
  %v147 = vadd.f32 %v50, %v146
  %v148 = vpop.f32.mrb[0].mxu0
  %v149 = vpop.f32.mrb[0].mxu0
  %v150 = vadd.f32 %v50, %v149
  %v151 = vpop.f32.mrb[0].mxu0
  %152 = vmatprep.mubr.bf16.mxu0 0
  %153 = vmatmul.mubr.bf16.gmra.mrb[0].mxu0 %v61
  %v154 = vpop.f32.mrb[0].mxu0
  %v155 = vadd.f32 %v50, %v154
  %v156 = vpop.f32.mrb[0].mxu0
  %v157 = vpop.f32.mrb[0].mxu0
  %v158 = vadd.f32 %v50, %v157
  %v159 = vpop.f32.mrb[0].mxu0
  %160 = vdwg.mxu0
  %v161 = vrot.slane %v25, 1
  %v162 = vrot.slane %v26, 1
  %v163 = vrot.slane %v27, 1
  %v164 = vrot.slane %v28, 1
  %v165 = vlaneseq
  %v166 = vshrl.u32 %v165, 7
  %vm167 = vcmp.lt.s32.totalorder %v166, 7
  %v168 = vsel %vm167, %v163, %v164
  %v169 = vsel %vm167, %v162, %v163
  %v170 = vsel %vm167, %v161, %v162
  %v171 = vsel %vm167, %v164, %v161
  %v172 = vpack.c.bf16 %v169, %v170
  %v173 = vpack.c.bf16 %v171, %v168
  %s174 = scalar_lea.vmem %s1, 64
  %v175 = vld [vmem:[%s174] sm:$0xf]
  %v176 = vld [vmem:[%s174 + $0x4] sm:$0xf]
  %v177 = vld [vmem:[%s174 + $0x8] sm:$0xf]
  %v178 = vld [vmem:[%s174 + $0xc] sm:$0xf]
  %v179 = vld [vmem:[%s174 + $0x10] sm:$0xf]
  %v180 = vld [vmem:[%s174 + $0x14] sm:$0xf]
  %v181 = vld [vmem:[%s174 + $0x18] sm:$0xf]
  %v182 = vld [vmem:[%s174 + $0x1c] sm:$0xf]
  %v183 = vld [vmem:[%s174 + $0x20] sm:$0xf]
  %v184 = vld [vmem:[%s174 + $0x24] sm:$0xf]
  %v185 = vld [vmem:[%s174 + $0x28] sm:$0xf]
  %v186 = vld [vmem:[%s174 + $0x2c] sm:$0xf]
  %v187 = vld [vmem:[%s174 + $0x30] sm:$0xf]
  %v188 = vld [vmem:[%s174 + $0x34] sm:$0xf]
  %v189 = vld [vmem:[%s174 + $0x38] sm:$0xf]
  %v190 = vld [vmem:[%s174 + $0x3c] sm:$0xf]
  %v207 = vunpack.c.l.b16 %v175
  %v208 = vunpack.c.l.b16 %v176
  %v209 = vunpack.c.l.b16 %v177
  %v210 = vunpack.c.l.b16 %v178
  %v211 = vunpack.c.l.b16 %v179
  %v212 = vunpack.c.l.b16 %v180
  %v213 = vunpack.c.l.b16 %v181
  %v214 = vunpack.c.l.b16 %v182
  %v215 = vunpack.c.l.b16 %v183
  %v216 = vunpack.c.l.b16 %v184
  %v217 = vunpack.c.l.b16 %v185
  %v218 = vunpack.c.l.b16 %v186
  %v219 = vunpack.c.l.b16 %v187
  %v220 = vunpack.c.l.b16 %v188
  %v221 = vunpack.c.l.b16 %v189
  %v222 = vunpack.c.l.b16 %v190
  %v223 = vpack.c.b16 %v208, %v207
  %v224 = vpack.c.b16 %v210, %v209
  %v225 = vpack.c.b16 %v212, %v211
  %v226 = vpack.c.b16 %v214, %v213
  %v227 = vpack.c.b16 %v216, %v215
  %v228 = vpack.c.b16 %v218, %v217
  %v229 = vpack.c.b16 %v220, %v219
  %v230 = vpack.c.b16 %v222, %v221
  %239 = vmatprep.subr.bf16.mxu0 0
  %240 = vmatpush1.bf16.msra.mxu0 %v223
  %241 = vmatprep.subr.bf16.mxu0 0
  %242 = vmatpush1.bf16.msra.mxu0 %v224
  %243 = vmatprep.subr.bf16.mxu0 0
  %244 = vmatpush1.bf16.msra.mxu0 %v225
  %245 = vmatprep.subr.bf16.mxu0 0
  %246 = vmatpush1.bf16.msra.mxu0 %v226
  %247 = vmatprep.subr.bf16.mxu0 0
  %248 = vmatpush1.bf16.msra.mxu0 %v227
  %249 = vmatprep.subr.bf16.mxu0 0
  %250 = vmatpush1.bf16.msra.mxu0 %v228
  %251 = vmatprep.subr.bf16.mxu0 0
  %252 = vmatpush1.bf16.msra.mxu0 %v229
  %253 = vmatprep.subr.bf16.mxu0 0
  %254 = vmatpush1.bf16.msra.mxu0 %v230
  %255 = vmatprep.subr.bf16.mxu0 0
  %256 = vmatpush1.bf16.msra.mxu0 0
  %257 = vmatprep.subr.bf16.mxu0 0
  %258 = vmatpush1.bf16.msra.mxu0 0
  %259 = vmatprep.subr.bf16.mxu0 0
  %260 = vmatpush1.bf16.msra.mxu0 0
  %261 = vmatprep.subr.bf16.mxu0 0
  %262 = vmatpush1.bf16.msra.mxu0 0
  %263 = vmatprep.subr.bf16.mxu0 0
  %264 = vmatpush1.bf16.msra.mxu0 0
  %265 = vmatprep.subr.bf16.mxu0 0
  %266 = vmatpush1.bf16.msra.mxu0 0
  %267 = vmatprep.subr.bf16.mxu0 0
  %268 = vmatpush1.bf16.msra.mxu0 0
  %269 = vmatprep.subr.bf16.mxu0 0
  %270 = vmatpush1.bf16.msra.mxu0 0
  %271 = vmatprep.mubr.bf16.mxu0 0
  %272 = vmatmul.mubr.bf16.gmra.mrb[0].mxu0 %v172
  %v273 = vpop.f32.mrb[0].mxu0
  %v274 = vadd.f32 0.0, %v273
  %v275 = vpop.f32.mrb[0].mxu0
  %v276 = vpop.f32.mrb[0].mxu0
  %v277 = vadd.f32 0.0, %v276
  %v278 = vpop.f32.mrb[0].mxu0
  %279 = vmatprep.mubr.bf16.mxu0 0
  %280 = vmatmul.mubr.bf16.gmra.mrb[0].mxu0 %v173
  %v281 = vpop.f32.mrb[0].mxu0
  %v282 = vadd.f32 0.0, %v281
  %v283 = vpop.f32.mrb[0].mxu0
  %v284 = vpop.f32.mrb[0].mxu0
  %v285 = vadd.f32 0.0, %v284
  %v286 = vpop.f32.mrb[0].mxu0
  %287 = vdwg.mxu0
  %v288 = vadd.f32 %v147, %v274
  %v289 = vadd.f32 %v150, %v277
  %v290 = vadd.f32 %v155, %v282
  %v291 = vadd.f32 %v158, %v285
  %v292 = vrot.slane %v25, 2
  %v293 = vrot.slane %v26, 2
  %v294 = vrot.slane %v27, 2
  %v295 = vrot.slane %v28, 2
  %vm296 = vcmp.lt.s32.totalorder %v166, 6
  %v297 = vsel %vm296, %v294, %v295
  %v298 = vsel %vm296, %v293, %v294
  %v299 = vsel %vm296, %v292, %v293
  %v300 = vsel %vm296, %v295, %v292
  %v301 = vpack.c.bf16 %v298, %v299
  %v302 = vpack.c.bf16 %v300, %v297
  %s303 = scalar_lea.vmem %s1, 128
  %v304 = vld [vmem:[%s303] sm:$0xf]
  %v305 = vld [vmem:[%s303 + $0x4] sm:$0xf]
  %v306 = vld [vmem:[%s303 + $0x8] sm:$0xf]
  %v307 = vld [vmem:[%s303 + $0xc] sm:$0xf]
  %v308 = vld [vmem:[%s303 + $0x10] sm:$0xf]
  %v309 = vld [vmem:[%s303 + $0x14] sm:$0xf]
  %v310 = vld [vmem:[%s303 + $0x18] sm:$0xf]
  %v311 = vld [vmem:[%s303 + $0x1c] sm:$0xf]
  %v312 = vld [vmem:[%s303 + $0x20] sm:$0xf]
  %v313 = vld [vmem:[%s303 + $0x24] sm:$0xf]
  %v314 = vld [vmem:[%s303 + $0x28] sm:$0xf]
  %v315 = vld [vmem:[%s303 + $0x2c] sm:$0xf]
  %v316 = vld [vmem:[%s303 + $0x30] sm:$0xf]
  %v317 = vld [vmem:[%s303 + $0x34] sm:$0xf]
  %v318 = vld [vmem:[%s303 + $0x38] sm:$0xf]
  %v319 = vld [vmem:[%s303 + $0x3c] sm:$0xf]
  %v336 = vunpack.c.l.b16 %v304
  %v337 = vunpack.c.l.b16 %v305
  %v338 = vunpack.c.l.b16 %v306
  %v339 = vunpack.c.l.b16 %v307
  %v340 = vunpack.c.l.b16 %v308
  %v341 = vunpack.c.l.b16 %v309
  %v342 = vunpack.c.l.b16 %v310
  %v343 = vunpack.c.l.b16 %v311
  %v344 = vunpack.c.l.b16 %v312
  %v345 = vunpack.c.l.b16 %v313
  %v346 = vunpack.c.l.b16 %v314
  %v347 = vunpack.c.l.b16 %v315
  %v348 = vunpack.c.l.b16 %v316
  %v349 = vunpack.c.l.b16 %v317
  %v350 = vunpack.c.l.b16 %v318
  %v351 = vunpack.c.l.b16 %v319
  %v352 = vpack.c.b16 %v337, %v336
  %v353 = vpack.c.b16 %v339, %v338
  %v354 = vpack.c.b16 %v341, %v340
  %v355 = vpack.c.b16 %v343, %v342
  %v356 = vpack.c.b16 %v345, %v344
  %v357 = vpack.c.b16 %v347, %v346
  %v358 = vpack.c.b16 %v349, %v348
  %v359 = vpack.c.b16 %v351, %v350
  %368 = vmatprep.subr.bf16.mxu0 0
  %369 = vmatpush1.bf16.msra.mxu0 %v352
  %370 = vmatprep.subr.bf16.mxu0 0
  %371 = vmatpush1.bf16.msra.mxu0 %v353
  %372 = vmatprep.subr.bf16.mxu0 0
  %373 = vmatpush1.bf16.msra.mxu0 %v354
  %374 = vmatprep.subr.bf16.mxu0 0
  %375 = vmatpush1.bf16.msra.mxu0 %v355
  %376 = vmatprep.subr.bf16.mxu0 0
  %377 = vmatpush1.bf16.msra.mxu0 %v356
  %378 = vmatprep.subr.bf16.mxu0 0
  %379 = vmatpush1.bf16.msra.mxu0 %v357
  %380 = vmatprep.subr.bf16.mxu0 0
  %381 = vmatpush1.bf16.msra.mxu0 %v358
  %382 = vmatprep.subr.bf16.mxu0 0
  %383 = vmatpush1.bf16.msra.mxu0 %v359
  %384 = vmatprep.subr.bf16.mxu0 0
  %385 = vmatpush1.bf16.msra.mxu0 0
  %386 = vmatprep.subr.bf16.mxu0 0
  %387 = vmatpush1.bf16.msra.mxu0 0
  %388 = vmatprep.subr.bf16.mxu0 0
  %389 = vmatpush1.bf16.msra.mxu0 0
  %390 = vmatprep.subr.bf16.mxu0 0
  %391 = vmatpush1.bf16.msra.mxu0 0
  %392 = vmatprep.subr.bf16.mxu0 0
  %393 = vmatpush1.bf16.msra.mxu0 0
  %394 = vmatprep.subr.bf16.mxu0 0
  %395 = vmatpush1.bf16.msra.mxu0 0
  %396 = vmatprep.subr.bf16.mxu0 0
  %397 = vmatpush1.bf16.msra.mxu0 0
  %398 = vmatprep.subr.bf16.mxu0 0
  %399 = vmatpush1.bf16.msra.mxu0 0
  %400 = vmatprep.mubr.bf16.mxu0 0
  %401 = vmatmul.mubr.bf16.gmra.mrb[0].mxu0 %v301
  %v402 = vpop.f32.mrb[0].mxu0
  %v403 = vadd.f32 0.0, %v402
  %v404 = vpop.f32.mrb[0].mxu0
  %v405 = vpop.f32.mrb[0].mxu0
  %v406 = vadd.f32 0.0, %v405
  %v407 = vpop.f32.mrb[0].mxu0
  %408 = vmatprep.mubr.bf16.mxu0 0
  %409 = vmatmul.mubr.bf16.gmra.mrb[0].mxu0 %v302
  %v410 = vpop.f32.mrb[0].mxu0
  %v411 = vadd.f32 0.0, %v410
  %v412 = vpop.f32.mrb[0].mxu0
  %v413 = vpop.f32.mrb[0].mxu0
  %v414 = vadd.f32 0.0, %v413
  %v415 = vpop.f32.mrb[0].mxu0
  %416 = vdwg.mxu0
  %v417 = vadd.f32 %v288, %v403
  %v418 = vadd.f32 %v289, %v406
  %v419 = vadd.f32 %v290, %v411
  %v420 = vadd.f32 %v291, %v414
  %v421 = vmul.f32 %v417, 0.5
  %v422 = vmul.f32 %v418, 0.5
  %v423 = vmul.f32 %v419, 0.5
  %v424 = vmul.f32 %v420, 0.5
  %v425 = vmul.f32 %v417, 0.044715
  %v426 = vmul.f32 %v418, 0.044715
  %v427 = vmul.f32 %v419, 0.044715
  %v428 = vmul.f32 %v420, 0.044715
  %v429 = vmul.f32 %v425, %v417
  %v430 = vmul.f32 %v426, %v418
  %v431 = vmul.f32 %v427, %v419
  %v432 = vmul.f32 %v428, %v420
  %v433 = vmul.f32 %v429, %v417
  %v434 = vmul.f32 %v430, %v418
  %v435 = vmul.f32 %v431, %v419
  %v436 = vmul.f32 %v432, %v420
  %v437 = vadd.f32 %v417, %v433
  %v438 = vadd.f32 %v418, %v434
  %v439 = vadd.f32 %v419, %v435
  %v440 = vadd.f32 %v420, %v436
  %v441 = vmul.f32 %v437, 0.7978846
  %v442 = vmul.f32 %v438, 0.7978846
  %v443 = vmul.f32 %v439, 0.7978846
  %v444 = vmul.f32 %v440, 0.7978846
  %v445 = vtanh.pop %v441
  %v446 = vtanh.pop %v442
  %v447 = vtanh.pop %v443
  %v448 = vtanh.pop %v444
  %v449 = vadd.f32 %v445, 1.0
  %v450 = vadd.f32 %v446, 1.0
  %v451 = vadd.f32 %v447, 1.0
  %v452 = vadd.f32 %v448, 1.0
  %v453 = vmul.f32 %v421, %v449
  %v454 = vmul.f32 %v422, %v450
  %v455 = vmul.f32 %v423, %v451
  %v456 = vmul.f32 %v424, %v452
  %v457 = vpack.c.bf16 %v454, %v453
  %v458 = vpack.c.bf16 %v456, %v455
  %v459 = vld [vmem:[%s3] sm:$0xf]
  %v460 = vld [vmem:[%s3 + $0x4] sm:$0xf]
  %v461 = vld [vmem:[%s3 + $0x8] sm:$0xf]
  %v462 = vld [vmem:[%s3 + $0xc] sm:$0xf]
  %v463 = vld [vmem:[%s3 + $0x10] sm:$0xf]
  %v464 = vld [vmem:[%s3 + $0x14] sm:$0xf]
  %v465 = vld [vmem:[%s3 + $0x18] sm:$0xf]
  %v466 = vld [vmem:[%s3 + $0x1c] sm:$0xf]
  %v467 = vld [vmem:[%s3 + $0x20] sm:$0xf]
  %v468 = vld [vmem:[%s3 + $0x24] sm:$0xf]
  %v469 = vld [vmem:[%s3 + $0x28] sm:$0xf]
  %v470 = vld [vmem:[%s3 + $0x2c] sm:$0xf]
  %v471 = vld [vmem:[%s3 + $0x30] sm:$0xf]
  %v472 = vld [vmem:[%s3 + $0x34] sm:$0xf]
  %v473 = vld [vmem:[%s3 + $0x38] sm:$0xf]
  %v474 = vld [vmem:[%s3 + $0x3c] sm:$0xf]
  %v475 = vld [vmem:[%s4] sm:$0x1]
  %v477 = vlaneseq
  %v478 = vshrl.u32 %v477, 7
  %v479 = vsub.s32 0, %v478
  %v480 = vrot.slane %v475, %v479
  %v498 = vunpack.c.l.b16 %v459
  %v499 = vunpack.c.l.b16 %v460
  %v500 = vunpack.c.l.b16 %v461
  %v501 = vunpack.c.l.b16 %v462
  %v502 = vunpack.c.l.b16 %v463
  %v503 = vunpack.c.l.b16 %v464
  %v504 = vunpack.c.l.b16 %v465
  %v505 = vunpack.c.l.b16 %v466
  %v506 = vunpack.c.l.b16 %v467
  %v507 = vunpack.c.l.b16 %v468
  %v508 = vunpack.c.l.b16 %v469
  %v509 = vunpack.c.l.b16 %v470
  %v510 = vunpack.c.l.b16 %v471
  %v511 = vunpack.c.l.b16 %v472
  %v512 = vunpack.c.l.b16 %v473
  %v513 = vunpack.c.l.b16 %v474
  %v514 = vpack.c.b16 %v499, %v498
  %v515 = vpack.c.b16 %v501, %v500
  %v516 = vpack.c.b16 %v503, %v502
  %v517 = vpack.c.b16 %v505, %v504
  %v518 = vpack.c.b16 %v507, %v506
  %v519 = vpack.c.b16 %v509, %v508
  %v520 = vpack.c.b16 %v511, %v510
  %v521 = vpack.c.b16 %v513, %v512
  %530 = vmatprep.subr.bf16.mxu0 0
  %531 = vmatpush1.bf16.msra.mxu0 %v514
  %532 = vmatprep.subr.bf16.mxu0 0
  %533 = vmatpush1.bf16.msra.mxu0 %v515
  %534 = vmatprep.subr.bf16.mxu0 0
  %535 = vmatpush1.bf16.msra.mxu0 %v516
  %536 = vmatprep.subr.bf16.mxu0 0
  %537 = vmatpush1.bf16.msra.mxu0 %v517
  %538 = vmatprep.subr.bf16.mxu0 0
  %539 = vmatpush1.bf16.msra.mxu0 %v518
  %540 = vmatprep.subr.bf16.mxu0 0
  %541 = vmatpush1.bf16.msra.mxu0 %v519
  %542 = vmatprep.subr.bf16.mxu0 0
  %543 = vmatpush1.bf16.msra.mxu0 %v520
  %544 = vmatprep.subr.bf16.mxu0 0
  %545 = vmatpush1.bf16.msra.mxu0 %v521
  %546 = vmatprep.subr.bf16.mxu0 0
  %547 = vmatpush1.bf16.msra.mxu0 0
  %548 = vmatprep.subr.bf16.mxu0 0
  %549 = vmatpush1.bf16.msra.mxu0 0
  %550 = vmatprep.subr.bf16.mxu0 0
  %551 = vmatpush1.bf16.msra.mxu0 0
  %552 = vmatprep.subr.bf16.mxu0 0
  %553 = vmatpush1.bf16.msra.mxu0 0
  %554 = vmatprep.subr.bf16.mxu0 0
  %555 = vmatpush1.bf16.msra.mxu0 0
  %556 = vmatprep.subr.bf16.mxu0 0
  %557 = vmatpush1.bf16.msra.mxu0 0
  %558 = vmatprep.subr.bf16.mxu0 0
  %559 = vmatpush1.bf16.msra.mxu0 0
  %560 = vmatprep.subr.bf16.mxu0 0
  %561 = vmatpush1.bf16.msra.mxu0 0
  %562 = vmatprep.mubr.bf16.mxu0 0
  %563 = vmatmul.mubr.bf16.gmra.mrb[0].mxu0 %v457
  %v564 = vpop.f32.mrb[0].mxu0
  %v565 = vadd.f32 %v480, %v564
  %v566 = vpop.f32.mrb[0].mxu0
  %v567 = vpop.f32.mrb[0].mxu0
  %v568 = vadd.f32 %v480, %v567
  %v569 = vpop.f32.mrb[0].mxu0
  %570 = vmatprep.mubr.bf16.mxu0 0
  %571 = vmatmul.mubr.bf16.gmra.mrb[0].mxu0 %v458
  %v572 = vpop.f32.mrb[0].mxu0
  %v573 = vadd.f32 %v480, %v572
  %v574 = vpop.f32.mrb[0].mxu0
  %v575 = vpop.f32.mrb[0].mxu0
  %v576 = vadd.f32 %v480, %v575
  %v577 = vpop.f32.mrb[0].mxu0
  %578 = vdwg.mxu0
  %v579 = vrot.slane %v453, 1
  %v580 = vrot.slane %v454, 1
  %v581 = vrot.slane %v455, 1
  %v582 = vrot.slane %v456, 1
  %v583 = vsel %vm167, %v581, %v582
  %v584 = vsel %vm167, %v580, %v581
  %v585 = vsel %vm167, %v579, %v580
  %v586 = vsel %vm167, %v582, %v579
  %v587 = vpack.c.bf16 %v584, %v585
  %v588 = vpack.c.bf16 %v586, %v583
  %s589 = scalar_lea.vmem %s3, 64
  %v590 = vld [vmem:[%s589] sm:$0xf]
  %v591 = vld [vmem:[%s589 + $0x4] sm:$0xf]
  %v592 = vld [vmem:[%s589 + $0x8] sm:$0xf]
  %v593 = vld [vmem:[%s589 + $0xc] sm:$0xf]
  %v594 = vld [vmem:[%s589 + $0x10] sm:$0xf]
  %v595 = vld [vmem:[%s589 + $0x14] sm:$0xf]
  %v596 = vld [vmem:[%s589 + $0x18] sm:$0xf]
  %v597 = vld [vmem:[%s589 + $0x1c] sm:$0xf]
  %v598 = vld [vmem:[%s589 + $0x20] sm:$0xf]
  %v599 = vld [vmem:[%s589 + $0x24] sm:$0xf]
  %v600 = vld [vmem:[%s589 + $0x28] sm:$0xf]
  %v601 = vld [vmem:[%s589 + $0x2c] sm:$0xf]
  %v602 = vld [vmem:[%s589 + $0x30] sm:$0xf]
  %v603 = vld [vmem:[%s589 + $0x34] sm:$0xf]
  %v604 = vld [vmem:[%s589 + $0x38] sm:$0xf]
  %v605 = vld [vmem:[%s589 + $0x3c] sm:$0xf]
  %v622 = vunpack.c.l.b16 %v590
  %v623 = vunpack.c.l.b16 %v591
  %v624 = vunpack.c.l.b16 %v592
  %v625 = vunpack.c.l.b16 %v593
  %v626 = vunpack.c.l.b16 %v594
  %v627 = vunpack.c.l.b16 %v595
  %v628 = vunpack.c.l.b16 %v596
  %v629 = vunpack.c.l.b16 %v597
  %v630 = vunpack.c.l.b16 %v598
  %v631 = vunpack.c.l.b16 %v599
  %v632 = vunpack.c.l.b16 %v600
  %v633 = vunpack.c.l.b16 %v601
  %v634 = vunpack.c.l.b16 %v602
  %v635 = vunpack.c.l.b16 %v603
  %v636 = vunpack.c.l.b16 %v604
  %v637 = vunpack.c.l.b16 %v605
  %v638 = vpack.c.b16 %v623, %v622
  %v639 = vpack.c.b16 %v625, %v624
  %v640 = vpack.c.b16 %v627, %v626
  %v641 = vpack.c.b16 %v629, %v628
  %v642 = vpack.c.b16 %v631, %v630
  %v643 = vpack.c.b16 %v633, %v632
  %v644 = vpack.c.b16 %v635, %v634
  %v645 = vpack.c.b16 %v637, %v636
  %654 = vmatprep.subr.bf16.mxu0 0
  %655 = vmatpush1.bf16.msra.mxu0 %v638
  %656 = vmatprep.subr.bf16.mxu0 0
  %657 = vmatpush1.bf16.msra.mxu0 %v639
  %658 = vmatprep.subr.bf16.mxu0 0
  %659 = vmatpush1.bf16.msra.mxu0 %v640
  %660 = vmatprep.subr.bf16.mxu0 0
  %661 = vmatpush1.bf16.msra.mxu0 %v641
  %662 = vmatprep.subr.bf16.mxu0 0
  %663 = vmatpush1.bf16.msra.mxu0 %v642
  %664 = vmatprep.subr.bf16.mxu0 0
  %665 = vmatpush1.bf16.msra.mxu0 %v643
  %666 = vmatprep.subr.bf16.mxu0 0
  %667 = vmatpush1.bf16.msra.mxu0 %v644
  %668 = vmatprep.subr.bf16.mxu0 0
  %669 = vmatpush1.bf16.msra.mxu0 %v645
  %670 = vmatprep.subr.bf16.mxu0 0
  %671 = vmatpush1.bf16.msra.mxu0 0
  %672 = vmatprep.subr.bf16.mxu0 0
  %673 = vmatpush1.bf16.msra.mxu0 0
  %674 = vmatprep.subr.bf16.mxu0 0
  %675 = vmatpush1.bf16.msra.mxu0 0
  %676 = vmatprep.subr.bf16.mxu0 0
  %677 = vmatpush1.bf16.msra.mxu0 0
  %678 = vmatprep.subr.bf16.mxu0 0
  %679 = vmatpush1.bf16.msra.mxu0 0
  %680 = vmatprep.subr.bf16.mxu0 0
  %681 = vmatpush1.bf16.msra.mxu0 0
  %682 = vmatprep.subr.bf16.mxu0 0
  %683 = vmatpush1.bf16.msra.mxu0 0
  %684 = vmatprep.subr.bf16.mxu0 0
  %685 = vmatpush1.bf16.msra.mxu0 0
  %686 = vmatprep.mubr.bf16.mxu0 0
  %687 = vmatmul.mubr.bf16.gmra.mrb[0].mxu0 %v587
  %v688 = vpop.f32.mrb[0].mxu0
  %v689 = vadd.f32 0.0, %v688
  %v690 = vpop.f32.mrb[0].mxu0
  %v691 = vpop.f32.mrb[0].mxu0
  %v692 = vadd.f32 0.0, %v691
  %v693 = vpop.f32.mrb[0].mxu0
  %694 = vmatprep.mubr.bf16.mxu0 0
  %695 = vmatmul.mubr.bf16.gmra.mrb[0].mxu0 %v588
  %v696 = vpop.f32.mrb[0].mxu0
  %v697 = vadd.f32 0.0, %v696
  %v698 = vpop.f32.mrb[0].mxu0
  %v699 = vpop.f32.mrb[0].mxu0
  %v700 = vadd.f32 0.0, %v699
  %v701 = vpop.f32.mrb[0].mxu0
  %702 = vdwg.mxu0
  %v703 = vadd.f32 %v565, %v689
  %v704 = vadd.f32 %v568, %v692
  %v705 = vadd.f32 %v573, %v697
  %v706 = vadd.f32 %v576, %v700
  %v707 = vrot.slane %v453, 2
  %v708 = vrot.slane %v454, 2
  %v709 = vrot.slane %v455, 2
  %v710 = vrot.slane %v456, 2
  %v711 = vsel %vm296, %v709, %v710
  %v712 = vsel %vm296, %v708, %v709
  %v713 = vsel %vm296, %v707, %v708
  %v714 = vsel %vm296, %v710, %v707
  %v715 = vpack.c.bf16 %v712, %v713
  %v716 = vpack.c.bf16 %v714, %v711
  %s717 = scalar_lea.vmem %s3, 128
  %v718 = vld [vmem:[%s717] sm:$0xf]
  %v719 = vld [vmem:[%s717 + $0x4] sm:$0xf]
  %v720 = vld [vmem:[%s717 + $0x8] sm:$0xf]
  %v721 = vld [vmem:[%s717 + $0xc] sm:$0xf]
  %v722 = vld [vmem:[%s717 + $0x10] sm:$0xf]
  %v723 = vld [vmem:[%s717 + $0x14] sm:$0xf]
  %v724 = vld [vmem:[%s717 + $0x18] sm:$0xf]
  %v725 = vld [vmem:[%s717 + $0x1c] sm:$0xf]
  %v726 = vld [vmem:[%s717 + $0x20] sm:$0xf]
  %v727 = vld [vmem:[%s717 + $0x24] sm:$0xf]
  %v728 = vld [vmem:[%s717 + $0x28] sm:$0xf]
  %v729 = vld [vmem:[%s717 + $0x2c] sm:$0xf]
  %v730 = vld [vmem:[%s717 + $0x30] sm:$0xf]
  %v731 = vld [vmem:[%s717 + $0x34] sm:$0xf]
  %v732 = vld [vmem:[%s717 + $0x38] sm:$0xf]
  %v733 = vld [vmem:[%s717 + $0x3c] sm:$0xf]
  %v750 = vunpack.c.l.b16 %v718
  %v751 = vunpack.c.l.b16 %v719
  %v752 = vunpack.c.l.b16 %v720
  %v753 = vunpack.c.l.b16 %v721
  %v754 = vunpack.c.l.b16 %v722
  %v755 = vunpack.c.l.b16 %v723
  %v756 = vunpack.c.l.b16 %v724
  %v757 = vunpack.c.l.b16 %v725
  %v758 = vunpack.c.l.b16 %v726
  %v759 = vunpack.c.l.b16 %v727
  %v760 = vunpack.c.l.b16 %v728
  %v761 = vunpack.c.l.b16 %v729
  %v762 = vunpack.c.l.b16 %v730
  %v763 = vunpack.c.l.b16 %v731
  %v764 = vunpack.c.l.b16 %v732
  %v765 = vunpack.c.l.b16 %v733
  %v766 = vpack.c.b16 %v751, %v750
  %v767 = vpack.c.b16 %v753, %v752
  %v768 = vpack.c.b16 %v755, %v754
  %v769 = vpack.c.b16 %v757, %v756
  %v770 = vpack.c.b16 %v759, %v758
  %v771 = vpack.c.b16 %v761, %v760
  %v772 = vpack.c.b16 %v763, %v762
  %v773 = vpack.c.b16 %v765, %v764
  %782 = vmatprep.subr.bf16.mxu0 0
  %783 = vmatpush1.bf16.msra.mxu0 %v766
  %784 = vmatprep.subr.bf16.mxu0 0
  %785 = vmatpush1.bf16.msra.mxu0 %v767
  %786 = vmatprep.subr.bf16.mxu0 0
  %787 = vmatpush1.bf16.msra.mxu0 %v768
  %788 = vmatprep.subr.bf16.mxu0 0
  %789 = vmatpush1.bf16.msra.mxu0 %v769
  %790 = vmatprep.subr.bf16.mxu0 0
  %791 = vmatpush1.bf16.msra.mxu0 %v770
  %792 = vmatprep.subr.bf16.mxu0 0
  %793 = vmatpush1.bf16.msra.mxu0 %v771
  %794 = vmatprep.subr.bf16.mxu0 0
  %795 = vmatpush1.bf16.msra.mxu0 %v772
  %796 = vmatprep.subr.bf16.mxu0 0
  %797 = vmatpush1.bf16.msra.mxu0 %v773
  %798 = vmatprep.subr.bf16.mxu0 0
  %799 = vmatpush1.bf16.msra.mxu0 0
  %800 = vmatprep.subr.bf16.mxu0 0
  %801 = vmatpush1.bf16.msra.mxu0 0
  %802 = vmatprep.subr.bf16.mxu0 0
  %803 = vmatpush1.bf16.msra.mxu0 0
  %804 = vmatprep.subr.bf16.mxu0 0
  %805 = vmatpush1.bf16.msra.mxu0 0
  %806 = vmatprep.subr.bf16.mxu0 0
  %807 = vmatpush1.bf16.msra.mxu0 0
  %808 = vmatprep.subr.bf16.mxu0 0
  %809 = vmatpush1.bf16.msra.mxu0 0
  %810 = vmatprep.subr.bf16.mxu0 0
  %811 = vmatpush1.bf16.msra.mxu0 0
  %812 = vmatprep.subr.bf16.mxu0 0
  %813 = vmatpush1.bf16.msra.mxu0 0
  %814 = vmatprep.mubr.bf16.mxu0 0
  %815 = vmatmul.mubr.bf16.gmra.mrb[0].mxu0 %v715
  %v816 = vpop.f32.mrb[0].mxu0
  %v817 = vadd.f32 0.0, %v816
  %v818 = vpop.f32.mrb[0].mxu0
  %v819 = vpop.f32.mrb[0].mxu0
  %v820 = vadd.f32 0.0, %v819
  %v821 = vpop.f32.mrb[0].mxu0
  %822 = vmatprep.mubr.bf16.mxu0 0
  %823 = vmatmul.mubr.bf16.gmra.mrb[0].mxu0 %v716
  %v824 = vpop.f32.mrb[0].mxu0
  %v825 = vadd.f32 0.0, %v824
  %v826 = vpop.f32.mrb[0].mxu0
  %v827 = vpop.f32.mrb[0].mxu0
  %v828 = vadd.f32 0.0, %v827
  %v829 = vpop.f32.mrb[0].mxu0
  %830 = vdwg.mxu0
  %v831 = vadd.f32 %v703, %v817
  %v832 = vadd.f32 %v704, %v820
  %v833 = vadd.f32 %v705, %v825
  %v834 = vadd.f32 %v706, %v828
  %835 = vst [vmem:[%s5] sm:$0xff] %v831
  %836 = vst [vmem:[%s5 + $0x8] sm:$0xff] %v832
  %837 = vst [vmem:[%s5 + $0x10] sm:$0xff] %v833
  %838 = vst [vmem:[%s5 + $0x18] sm:$0xff] %v834
  // Predicated region
  $region22: #{forward.1} parent=0 // pred_check
    _
  $region23: #{forward.1} parent=0 // pred_check_branch
    %840 = sbr.rel (0) target = $region25
  $region24: #{forward.1} parent=0 // pred_region
    _
  $region25: #{forward.1} parent=0 // pred_fallthru
    _
  // Predicated region
  $region26: #{forward.1} parent=0 // pred_check
    _
  $region27: #{forward.1} parent=0 // pred_check_branch
    %842 = sbr.rel (0) target = $region29
  $region28: #{forward.1} parent=0 // pred_region
    _
  $region29: #{forward.1} parent=0 // pred_fallthru
    _

</llo_original>
